<compile_context>
chip_gen: v7x
topology: tpu7x:2x2x1
jax: 0.10.0
libtpu: 0.0.40
codegen_flags: <defaults>
</compile_context>

<pallas_src>
import functools

import jax
import jax.numpy as jnp
from jax.experimental import pallas as pl
from jax.experimental.pallas import tpu as pltpu


def _round_up(x, m):
    return ((x + m - 1) // m) * m


# ----------------------------------------------------------------------------
# Fused kernel: one time-tile of TM samples per grid step.
#   layout: channels on sublanes, time on lanes (lane-dense everywhere).
# ----------------------------------------------------------------------------
def _fused_kernel(wave_ref, enc_w_ref, enc_b_ref, mix_w_ref, mix_b_ref,
                  up_w_ref, up_b_ref, out_p_ref, out_b_ref, o_ref,
                  *, tm, ktaps, up):
    t = pl.program_id(1)
    start = pl.multiple_of(t * tm, 128)

    # Aligned waveform window with right halo: [1, tm + 128] (time on lanes).
    win = wave_ref[0, :, pl.ds(start, tm + 128)]              # f32 [1, tm+128]

    # ---- model_m stage 1: 7-tap 'same' conv as shifted VPU FMAs --------------
    # (K=7 would waste >94% of the MXU contraction depth; VPU slots are free.)
    hidden = enc_w_ref.shape[0]
    acc = jnp.zeros((hidden, tm), jnp.float32)
    for k in range(ktaps):                                    # static unroll
        xk = win[:, k:k + tm]                                 # [1, tm]
        wk = enc_w_ref[:, k:k + 1]                            # [hidden, 1]
        acc = acc + wk * xk                                   # outer-product FMA
    h = jnp.maximum(acc + enc_b_ref[...], 0.0)                # [hidden, tm]

    # ---- model_m stage 2: channel mix (MXU, bf16 in / f32 accumulate) --------
    m = jnp.dot(mix_w_ref[...], h.astype(jnp.bfloat16),
                preferred_element_type=jnp.float32)
    m = jnp.maximum(m + mix_b_ref[...], 0.0)                  # [hidden, tm]

    # ---- model_g stage 1: ConvTranspose1d(k=2, s=2) stand-in ------------------
    u = jnp.dot(up_w_ref[...], m.astype(jnp.bfloat16),
                preferred_element_type=jnp.float32)
    u = jnp.maximum(u + up_b_ref[...], 0.0)                   # [up*hidden, tm]

    # ---- model_g stage 2: output projection + tanh, lane-dense ---------------
    # out_p_ref is block-diagonal [up, up*hidden]: y[p, t] = wave at time t*up+p
    y = jnp.dot(out_p_ref[...], u.astype(jnp.bfloat16),
                preferred_element_type=jnp.float32)
    y = jnp.tanh(y + out_b_ref[...])                          # [up, tm]

    o_ref[...] = y.reshape(1, up, tm).astype(o_ref.dtype)


# ----------------------------------------------------------------------------
# Parameters (deterministic init in-script; NOT a checkpoint load).
# ----------------------------------------------------------------------------
def init_params(key, hidden, kernel_size=7, upsample=2):
    ks = jax.random.split(key, 8)
    scale = 0.1
    return {
        # model_m (masknet / encoder stand-in)
        "enc_w": scale * jax.random.normal(ks[0], (kernel_size, hidden), jnp.float32),
        "enc_b": jnp.zeros((hidden,), jnp.float32),
        "mix_w": scale * jax.random.normal(ks[1], (hidden, hidden), jnp.float32),
        "mix_b": jnp.zeros((hidden,), jnp.float32),
        # model_g (generator stand-in)
        "up_w": scale * jax.random.normal(ks[2], (hidden, upsample * hidden), jnp.float32),
        "up_b": jnp.zeros((upsample * hidden,), jnp.float32),
        "out_w": scale * jax.random.normal(ks[3], (hidden, 1), jnp.float32),
        "out_b": jnp.zeros((1,), jnp.float32),
    }


# ----------------------------------------------------------------------------
# Forward pass:  outputs = model_g(model_m(inputs))   (single fused kernel)
# ----------------------------------------------------------------------------
def network_wrapper_forward(params, inputs, *, tm=512):
    B, Cin, T = inputs.shape
    assert Cin == 1
    hidden = params["mix_w"].shape[0]
    up = params["up_w"].shape[1] // hidden
    ktaps = params["enc_w"].shape[0]
    pad = ktaps // 2

    # Row tile (time samples per grid step): multiple of 128, no bigger than the
    # (padded) sequence.
    tm = min(tm, _round_up(T, 128))
    T_eff = _round_up(T, tm)
    T_w = T_eff + 128                      # +128 halo so every window load is aligned

    # Padded waveform, kept VMEM-resident per batch: left pad = conv 'same' pad,
    # right pad fills up to T_eff + 128.
    wave = jnp.pad(inputs[:, 0, :].astype(jnp.float32),
                   ((0, 0), (pad, T_w - T - pad)))
    wave = wave.reshape(B, 1, T_w)

    # Weights in channels-on-sublanes layout (transposed); matmul weights in bf16.
    enc_wT = params["enc_w"].T.astype(jnp.float32)                      # [hidden, k]
    enc_b = params["enc_b"].reshape(hidden, 1).astype(jnp.float32)
    mix_wT = params["mix_w"].T.astype(jnp.bfloat16)                     # [hidden, hidden]
    mix_b = params["mix_b"].reshape(hidden, 1).astype(jnp.float32)
    up_wT = params["up_w"].T.astype(jnp.bfloat16)                       # [up*hidden, hidden]
    up_b = params["up_b"].reshape(up * hidden, 1).astype(jnp.float32)
    # Block-diagonal output projection: y[p,:] = out_w . u[p*hidden:(p+1)*hidden,:]
    out_proj = jnp.kron(jnp.eye(up, dtype=jnp.float32),
                        params["out_w"].T).astype(jnp.bfloat16)          # [up, up*hidden]
    out_b = jnp.broadcast_to(params["out_b"].reshape(1, 1), (up, 1)).astype(jnp.float32)

    n_t = T_eff // tm
    kernel = functools.partial(_fused_kernel, tm=tm, ktaps=ktaps, up=up)

    out = pl.pallas_call(
        kernel,
        out_shape=jax.ShapeDtypeStruct((B, up, T_eff), jnp.float32),
        grid=(B, n_t),
        in_specs=[
            # per-batch padded waveform, resident across the time-tile axis
            pl.BlockSpec((1, 1, T_w), lambda b, t: (b, 0, 0)),
            # weights / biases: constant index_map -> loaded once, VMEM-resident
            pl.BlockSpec((hidden, ktaps), lambda b, t: (0, 0)),
            pl.BlockSpec((hidden, 1), lambda b, t: (0, 0)),
            pl.BlockSpec((hidden, hidden), lambda b, t: (0, 0)),
            pl.BlockSpec((hidden, 1), lambda b, t: (0, 0)),
            pl.BlockSpec((up * hidden, hidden), lambda b, t: (0, 0)),
            pl.BlockSpec((up * hidden, 1), lambda b, t: (0, 0)),
            pl.BlockSpec((up, up * hidden), lambda b, t: (0, 0)),
            pl.BlockSpec((up, 1), lambda b, t: (0, 0)),
        ],
        # lane-dense output tile: (1, up, tm), time on lanes
        out_specs=pl.BlockSpec((1, up, tm), lambda b, t: (b, 0, t)),
        compiler_params=pltpu.CompilerParams(
            dimension_semantics=("parallel", "parallel"),
            vmem_limit_bytes=32 * 1024 * 1024),
    )(wave, enc_wT, enc_b, mix_wT, mix_b, up_wT, up_b, out_proj, out_b)

    # out[b, p, t] = waveform sample at time t*up + p  ->  [B, 1, T*up] (NCL).
    out = out[:, :, :T]
    out = jnp.transpose(out, (0, 2, 1)).reshape(B, 1, T * up)
    return out


# ----------------------------------------------------------------------------
# Pure-JAX f32 reference (same stand-in math) for a sanity check.
# ----------------------------------------------------------------------------
def _reference_forward(params, inputs):
    B, _, T = inputs.shape
    x = inputs[:, 0, :]
    k = params["enc_w"].shape[0]
    pad = k // 2
    xp = jnp.pad(x, ((0, 0), (pad, pad)))
    patches = jnp.stack([xp[:, i:i + T] for i in range(k)], axis=-1)   # [B,T,k]
    h = jax.nn.relu(patches.reshape(B * T, k) @ params["enc_w"] + params["enc_b"])
    h = jax.nn.relu(h @ params["mix_w"] + params["mix_b"])
    u = jax.nn.relu(h @ params["up_w"] + params["up_b"])
    hidden = params["mix_w"].shape[0]
    up = params["up_w"].shape[1] // hidden
    u = u.reshape(B, T, up, hidden).reshape(B * T * up, hidden)
    y = jnp.tanh(u @ params["out_w"] + params["out_b"])
    return y.reshape(B, 1, T * up)


if __name__ == "__main__":
    B, T, HIDDEN, UP = 2, 300, 32, 2
    key = jax.random.PRNGKey(0)
    k_param, k_in = jax.random.split(key)

    params = init_params(k_param, hidden=HIDDEN, upsample=UP)
    inputs = jax.random.normal(k_in, (B, 1, T), jnp.float32)   # [B, 1, T] waveform

    # tm=128 at toy sizes -> 3 time tiles per batch, exercises tiling + halo + crop.
    fwd = jax.jit(functools.partial(network_wrapper_forward, tm=128))
    out = fwd(params, inputs)
    jax.block_until_ready(out)

    assert out.shape == (B, 1, T * UP), out.shape
    assert out.dtype == jnp.float32
    assert bool(jnp.all(jnp.isfinite(out)))

    ref = _reference_forward(params, inputs)
    max_err = float(jnp.max(jnp.abs(out - ref)))
    assert max_err < 5e-2, f"max abs err vs f32 reference: {max_err}"

    print("KERNEL_OK")
</pallas_src>

<mosaic_0001>
module attributes {stable_mosaic.version = 11 : i64} {
  func.func @_fused_kernel(%arg0: i32, %arg1: i32, %arg2: memref<1x1x512xf32, #tpu.memory_space<vmem>>, %arg3: memref<32x7xf32, #tpu.memory_space<vmem>>, %arg4: memref<32x1xf32, #tpu.memory_space<vmem>>, %arg5: memref<32x32xbf16, #tpu.memory_space<vmem>>, %arg6: memref<32x1xf32, #tpu.memory_space<vmem>>, %arg7: memref<64x32xbf16, #tpu.memory_space<vmem>>, %arg8: memref<64x1xf32, #tpu.memory_space<vmem>>, %arg9: memref<2x64xbf16, #tpu.memory_space<vmem>>, %arg10: memref<2x1xf32, #tpu.memory_space<vmem>>, %arg11: memref<1x2x128xf32, #tpu.memory_space<vmem>>) attributes {dimension_semantics = [#tpu.dimension_semantics<parallel>, #tpu.dimension_semantics<parallel>], iteration_bounds = array<i64: 2, 3>, scalar_prefetch = 0 : i64, scratch_operands = 0 : i64, tpu.core_type = #tpu.core_type<tc>, window_params = [{transform_indices = @transform_0, window_bounds = array<i64: 1, 1, 512>}, {pipeline_mode = #tpu.pipeline_mode<synchronous>, transform_indices = @transform_1, window_bounds = array<i64: 32, 7>}, {pipeline_mode = #tpu.pipeline_mode<synchronous>, transform_indices = @transform_2, window_bounds = array<i64: 32, 1>}, {pipeline_mode = #tpu.pipeline_mode<synchronous>, transform_indices = @transform_3, window_bounds = array<i64: 32, 32>}, {pipeline_mode = #tpu.pipeline_mode<synchronous>, transform_indices = @transform_4, window_bounds = array<i64: 32, 1>}, {pipeline_mode = #tpu.pipeline_mode<synchronous>, transform_indices = @transform_5, window_bounds = array<i64: 64, 32>}, {pipeline_mode = #tpu.pipeline_mode<synchronous>, transform_indices = @transform_6, window_bounds = array<i64: 64, 1>}, {pipeline_mode = #tpu.pipeline_mode<synchronous>, transform_indices = @transform_7, window_bounds = array<i64: 2, 64>}, {pipeline_mode = #tpu.pipeline_mode<synchronous>, transform_indices = @transform_8, window_bounds = array<i64: 2, 1>}, {transform_indices = @transform_9, window_bounds = array<i64: 1, 2, 128>}]} {
    %c128_i32 = arith.constant 128 : i32
    %0 = arith.muli %arg1, %c128_i32 : i32
    %1 = tpu.assume_multiple %0, 128 : i32
    %c0 = arith.constant 0 : index
    %c0_0 = arith.constant 0 : index
    %2 = arith.index_cast %1 : i32 to index
    %3 = vector.load %arg2[%c0, %c0_0, %2] : memref<1x1x512xf32, #tpu.memory_space<vmem>>, vector<1x1x256xf32>
    %4 = vector.shape_cast %3 : vector<1x1x256xf32> to vector<1x256xf32>
    %cst = arith.constant 0.000000e+00 : f32
    %5 = vector.broadcast %cst : f32 to vector<32x128xf32>
    %6 = vector.extract_strided_slice %4 {offsets = [0, 0], sizes = [1, 128], strides = [1, 1]} : vector<1x256xf32> to vector<1x128xf32>
    %c0_1 = arith.constant 0 : index
    %c0_2 = arith.constant 0 : index
    %7 = vector.load %arg3[%c0_1, %c0_2] : memref<32x7xf32, #tpu.memory_space<vmem>>, vector<32x1xf32>
    %8 = vector.broadcast %7 : vector<32x1xf32> to vector<32x128xf32>
    %9 = vector.broadcast %6 : vector<1x128xf32> to vector<32x128xf32>
    %10 = arith.mulf %8, %9 : vector<32x128xf32>
    %11 = arith.addf %5, %10 : vector<32x128xf32>
    %12 = vector.extract_strided_slice %4 {offsets = [0, 1], sizes = [1, 128], strides = [1, 1]} : vector<1x256xf32> to vector<1x128xf32>
    %c0_3 = arith.constant 0 : index
    %c1 = arith.constant 1 : index
    %13 = vector.load %arg3[%c0_3, %c1] : memref<32x7xf32, #tpu.memory_space<vmem>>, vector<32x1xf32>
    %14 = vector.broadcast %13 : vector<32x1xf32> to vector<32x128xf32>
    %15 = vector.broadcast %12 : vector<1x128xf32> to vector<32x128xf32>
    %16 = arith.mulf %14, %15 : vector<32x128xf32>
    %17 = arith.addf %11, %16 : vector<32x128xf32>
    %18 = vector.extract_strided_slice %4 {offsets = [0, 2], sizes = [1, 128], strides = [1, 1]} : vector<1x256xf32> to vector<1x128xf32>
    %c0_4 = arith.constant 0 : index
    %c2 = arith.constant 2 : index
    %19 = vector.load %arg3[%c0_4, %c2] : memref<32x7xf32, #tpu.memory_space<vmem>>, vector<32x1xf32>
    %20 = vector.broadcast %19 : vector<32x1xf32> to vector<32x128xf32>
    %21 = vector.broadcast %18 : vector<1x128xf32> to vector<32x128xf32>
    %22 = arith.mulf %20, %21 : vector<32x128xf32>
    %23 = arith.addf %17, %22 : vector<32x128xf32>
    %24 = vector.extract_strided_slice %4 {offsets = [0, 3], sizes = [1, 128], strides = [1, 1]} : vector<1x256xf32> to vector<1x128xf32>
    %c0_5 = arith.constant 0 : index
    %c3 = arith.constant 3 : index
    %25 = vector.load %arg3[%c0_5, %c3] : memref<32x7xf32, #tpu.memory_space<vmem>>, vector<32x1xf32>
    %26 = vector.broadcast %25 : vector<32x1xf32> to vector<32x128xf32>
    %27 = vector.broadcast %24 : vector<1x128xf32> to vector<32x128xf32>
    %28 = arith.mulf %26, %27 : vector<32x128xf32>
    %29 = arith.addf %23, %28 : vector<32x128xf32>
    %30 = vector.extract_strided_slice %4 {offsets = [0, 4], sizes = [1, 128], strides = [1, 1]} : vector<1x256xf32> to vector<1x128xf32>
    %c0_6 = arith.constant 0 : index
    %c4 = arith.constant 4 : index
    %31 = vector.load %arg3[%c0_6, %c4] : memref<32x7xf32, #tpu.memory_space<vmem>>, vector<32x1xf32>
    %32 = vector.broadcast %31 : vector<32x1xf32> to vector<32x128xf32>
    %33 = vector.broadcast %30 : vector<1x128xf32> to vector<32x128xf32>
    %34 = arith.mulf %32, %33 : vector<32x128xf32>
    %35 = arith.addf %29, %34 : vector<32x128xf32>
    %36 = vector.extract_strided_slice %4 {offsets = [0, 5], sizes = [1, 128], strides = [1, 1]} : vector<1x256xf32> to vector<1x128xf32>
    %c0_7 = arith.constant 0 : index
    %c5 = arith.constant 5 : index
    %37 = vector.load %arg3[%c0_7, %c5] : memref<32x7xf32, #tpu.memory_space<vmem>>, vector<32x1xf32>
    %38 = vector.broadcast %37 : vector<32x1xf32> to vector<32x128xf32>
    %39 = vector.broadcast %36 : vector<1x128xf32> to vector<32x128xf32>
    %40 = arith.mulf %38, %39 : vector<32x128xf32>
    %41 = arith.addf %35, %40 : vector<32x128xf32>
    %42 = vector.extract_strided_slice %4 {offsets = [0, 6], sizes = [1, 128], strides = [1, 1]} : vector<1x256xf32> to vector<1x128xf32>
    %c0_8 = arith.constant 0 : index
    %c6 = arith.constant 6 : index
    %43 = vector.load %arg3[%c0_8, %c6] : memref<32x7xf32, #tpu.memory_space<vmem>>, vector<32x1xf32>
    %44 = vector.broadcast %43 : vector<32x1xf32> to vector<32x128xf32>
    %45 = vector.broadcast %42 : vector<1x128xf32> to vector<32x128xf32>
    %46 = arith.mulf %44, %45 : vector<32x128xf32>
    %47 = arith.addf %41, %46 : vector<32x128xf32>
    %c0_9 = arith.constant 0 : index
    %c0_10 = arith.constant 0 : index
    %48 = vector.load %arg4[%c0_9, %c0_10] : memref<32x1xf32, #tpu.memory_space<vmem>>, vector<32x1xf32>
    %49 = vector.broadcast %48 : vector<32x1xf32> to vector<32x128xf32>
    %50 = arith.addf %47, %49 : vector<32x128xf32>
    %cst_11 = arith.constant 0.000000e+00 : f32
    %51 = vector.broadcast %cst_11 : f32 to vector<32x128xf32>
    %52 = arith.maximumf %50, %51 : vector<32x128xf32>
    %c0_12 = arith.constant 0 : index
    %c0_13 = arith.constant 0 : index
    %53 = vector.load %arg5[%c0_12, %c0_13] : memref<32x32xbf16, #tpu.memory_space<vmem>>, vector<32x32xbf16>
    %54 = arith.truncf %52 : vector<32x128xf32> to vector<32x128xbf16>
    %cst_14 = arith.constant dense<0.000000e+00> : vector<32x128xf32>
    %55 = tpu.matmul %53, %54, %cst_14 {dimension_numbers = #tpu.dot_dimension_numbers<[1], [0], [0], [1], [0, 0, 1, 1], [], []>} : vector<32x32xbf16>, vector<32x128xbf16>, vector<32x128xf32> -> vector<32x128xf32>
    %c0_15 = arith.constant 0 : index
    %c0_16 = arith.constant 0 : index
    %56 = vector.load %arg6[%c0_15, %c0_16] : memref<32x1xf32, #tpu.memory_space<vmem>>, vector<32x1xf32>
    %57 = vector.broadcast %56 : vector<32x1xf32> to vector<32x128xf32>
    %58 = arith.addf %55, %57 : vector<32x128xf32>
    %cst_17 = arith.constant 0.000000e+00 : f32
    %59 = vector.broadcast %cst_17 : f32 to vector<32x128xf32>
    %60 = arith.maximumf %58, %59 : vector<32x128xf32>
    %c0_18 = arith.constant 0 : index
    %c0_19 = arith.constant 0 : index
    %61 = vector.load %arg7[%c0_18, %c0_19] : memref<64x32xbf16, #tpu.memory_space<vmem>>, vector<64x32xbf16>
    %62 = arith.truncf %60 : vector<32x128xf32> to vector<32x128xbf16>
    %cst_20 = arith.constant dense<0.000000e+00> : vector<64x128xf32>
    %63 = tpu.matmul %61, %62, %cst_20 {dimension_numbers = #tpu.dot_dimension_numbers<[1], [0], [0], [1], [0, 0, 1, 1], [], []>} : vector<64x32xbf16>, vector<32x128xbf16>, vector<64x128xf32> -> vector<64x128xf32>
    %c0_21 = arith.constant 0 : index
    %c0_22 = arith.constant 0 : index
    %64 = vector.load %arg8[%c0_21, %c0_22] : memref<64x1xf32, #tpu.memory_space<vmem>>, vector<64x1xf32>
    %65 = vector.broadcast %64 : vector<64x1xf32> to vector<64x128xf32>
    %66 = arith.addf %63, %65 : vector<64x128xf32>
    %cst_23 = arith.constant 0.000000e+00 : f32
    %67 = vector.broadcast %cst_23 : f32 to vector<64x128xf32>
    %68 = arith.maximumf %66, %67 : vector<64x128xf32>
    %c0_24 = arith.constant 0 : index
    %c0_25 = arith.constant 0 : index
    %69 = vector.load %arg9[%c0_24, %c0_25] : memref<2x64xbf16, #tpu.memory_space<vmem>>, vector<2x64xbf16>
    %70 = arith.truncf %68 : vector<64x128xf32> to vector<64x128xbf16>
    %cst_26 = arith.constant dense<0.000000e+00> : vector<2x128xf32>
    %71 = tpu.matmul %69, %70, %cst_26 {dimension_numbers = #tpu.dot_dimension_numbers<[1], [0], [0], [1], [0, 0, 1, 1], [], []>} : vector<2x64xbf16>, vector<64x128xbf16>, vector<2x128xf32> -> vector<2x128xf32>
    %c0_27 = arith.constant 0 : index
    %c0_28 = arith.constant 0 : index
    %72 = vector.load %arg10[%c0_27, %c0_28] : memref<2x1xf32, #tpu.memory_space<vmem>>, vector<2x1xf32>
    %73 = vector.broadcast %72 : vector<2x1xf32> to vector<2x128xf32>
    %74 = arith.addf %71, %73 : vector<2x128xf32>
    %75 = math.tanh %74 : vector<2x128xf32>
    %76 = vector.shape_cast %75 : vector<2x128xf32> to vector<1x2x128xf32>
    %c0_29 = arith.constant 0 : index
    %c0_30 = arith.constant 0 : index
    %c0_31 = arith.constant 0 : index
    %77 = vector.load %arg11[%c0_29, %c0_30, %c0_31] : memref<1x2x128xf32, #tpu.memory_space<vmem>>, vector<1x2x128xf32>
    tpu.vector_store %arg11[%c0_29, %c0_30, %c0_31], %76 {strides = array<i32>} : memref<1x2x128xf32, #tpu.memory_space<vmem>>, vector<1x2x128xf32>,
    return
  }
  func.func @transform_0(%arg0: i32, %arg1: i32) -> (i32, i32, i32) {
    %c0_i32 = arith.constant 0 : i32
    %c0_i32_0 = arith.constant 0 : i32
    %c0_i32_1 = arith.constant 0 : i32
    return %arg0, %c0_i32, %c0_i32_0 : i32, i32, i32
  }
  func.func @transform_1(%arg0: i32, %arg1: i32) -> (i32, i32) {
    %c0_i32 = arith.constant 0 : i32
    %c0_i32_0 = arith.constant 0 : i32
    %c0_i32_1 = arith.constant 0 : i32
    return %c0_i32, %c0_i32_0 : i32, i32
  }
  func.func @transform_2(%arg0: i32, %arg1: i32) -> (i32, i32) {
    %c0_i32 = arith.constant 0 : i32
    %c0_i32_0 = arith.constant 0 : i32
    %c0_i32_1 = arith.constant 0 : i32
    return %c0_i32, %c0_i32_0 : i32, i32
  }
  func.func @transform_3(%arg0: i32, %arg1: i32) -> (i32, i32) {
    %c0_i32 = arith.constant 0 : i32
    %c0_i32_0 = arith.constant 0 : i32
    %c0_i32_1 = arith.constant 0 : i32
    return %c0_i32, %c0_i32_0 : i32, i32
  }
  func.func @transform_4(%arg0: i32, %arg1: i32) -> (i32, i32) {
    %c0_i32 = arith.constant 0 : i32
    %c0_i32_0 = arith.constant 0 : i32
    %c0_i32_1 = arith.constant 0 : i32
    return %c0_i32, %c0_i32_0 : i32, i32
  }
  func.func @transform_5(%arg0: i32, %arg1: i32) -> (i32, i32) {
    %c0_i32 = arith.constant 0 : i32
    %c0_i32_0 = arith.constant 0 : i32
    %c0_i32_1 = arith.constant 0 : i32
    return %c0_i32, %c0_i32_0 : i32, i32
  }
  func.func @transform_6(%arg0: i32, %arg1: i32) -> (i32, i32) {
    %c0_i32 = arith.constant 0 : i32
    %c0_i32_0 = arith.constant 0 : i32
    %c0_i32_1 = arith.constant 0 : i32
    return %c0_i32, %c0_i32_0 : i32, i32
  }
  func.func @transform_7(%arg0: i32, %arg1: i32) -> (i32, i32) {
    %c0_i32 = arith.constant 0 : i32
    %c0_i32_0 = arith.constant 0 : i32
    %c0_i32_1 = arith.constant 0 : i32
    return %c0_i32, %c0_i32_0 : i32, i32
  }
  func.func @transform_8(%arg0: i32, %arg1: i32) -> (i32, i32) {
    %c0_i32 = arith.constant 0 : i32
    %c0_i32_0 = arith.constant 0 : i32
    %c0_i32_1 = arith.constant 0 : i32
    return %c0_i32, %c0_i32_0 : i32, i32
  }
  func.func @transform_9(%arg0: i32, %arg1: i32) -> (i32, i32, i32) {
    %c0_i32 = arith.constant 0 : i32
    %c0_i32_0 = arith.constant 0 : i32
    return %arg0, %c0_i32, %arg1 : i32, i32, i32
  }
}

</mosaic_0001>

<llo_original>
// kernel: network_wrapper_forward.1
$region0: #{network_wrapper_forward.1}
  #allocation0 [shape = 'u32[]', space=smem, size = 0x4, offset = 0x4, fixed_abs, tag = 'smem constant byte address 0x4 - core index']
  #allocation1 [shape = 'u32[144,128]{1,0:T(1,128)}', space=vmem, size = 0x12000, scoped, tag = 'internal scratch']
  %s0 = inlined_call_operand.vmem [shape: f32[2,1,512], index: 0, kind: input, shape index: {}]
  %s1 = inlined_call_operand.vmem [shape: f32[32,7], index: 1, kind: input, shape index: {}]
  %s2 = inlined_call_operand.vmem [shape: f32[32,1], index: 2, kind: input, shape index: {}]
  %s3 = inlined_call_operand.vmem [shape: bf16[32,32], index: 3, kind: input, shape index: {}]
  %s4 = inlined_call_operand.vmem [shape: f32[32,1], index: 4, kind: input, shape index: {}]
  %s5 = inlined_call_operand.vmem [shape: bf16[64,32], index: 5, kind: input, shape index: {}]
  %s6 = inlined_call_operand.vmem [shape: f32[64,1], index: 6, kind: input, shape index: {}]
  %s7 = inlined_call_operand.vmem [shape: bf16[2,64], index: 7, kind: input, shape index: {}]
  %s8 = inlined_call_operand.vmem [shape: f32[2,1], index: 8, kind: input, shape index: {}]
  %s9 = inlined_call_operand.vmem [shape: f32[2,2,384], index: 9, kind: output, shape index: {}]
  %s10 = sld [smem:[#allocation0]]
  $region69: #{network_wrapper_forward.1} parent=0
    _
  %s12 = ssub.s32 1, %s10
  %s13 = scalar_select 0, %s12, %s10
  loop: start=0, step=1, limit=8
  $region2: #{network_wrapper_forward.1} parent=0 // loop_pre_header
    _
  $region3: #{network_wrapper_forward.1} parent=0 // loop_header
    %s15 = sphi 0, %s19
    %p16 = scmp.ge.s32.totalorder %s15, 8
    %s22 = sphi 0, %s34
    %s23 = sphi 0, %s30
    %s24 = sphi 0, %s22
    %s25 = sphi 0, %s23
    %s26 = sphi 0, %s24
    %s27 = sphi 0, %s25
    %s37 = sphi 0, %s39
    %s40 = sphi 0, %s37
    %s41 = sphi 0, %s40
    %s57 = sphi 0, %s41
    %s61 = sphi 0, %s61
    %s63 = sphi 0, %s61
    %s64 = sphi 0, %s63
    %s78 = sphi 0, %s64
    %s82 = sphi 0, %s82
    %s84 = sphi 0, %s82
    %s85 = sphi 0, %s84
    %s99 = sphi 0, %s85
    %s103 = sphi 0, %s103
    %s105 = sphi 0, %s103
    %s106 = sphi 0, %s105
    %s120 = sphi 0, %s106
    %s124 = sphi 0, %s124
    %s126 = sphi 0, %s124
    %s127 = sphi 0, %s126
    %s141 = sphi 0, %s127
    %s145 = sphi 0, %s145
    %s147 = sphi 0, %s145
    %s148 = sphi 0, %s147
    %s162 = sphi 0, %s148
    %s166 = sphi 0, %s166
    %s168 = sphi 0, %s166
    %s169 = sphi 0, %s168
    %s183 = sphi 0, %s169
    %s187 = sphi 0, %s187
    %s189 = sphi 0, %s187
    %s190 = sphi 0, %s189
    %s204 = sphi 0, %s190
    %s208 = sphi 0, %s208
    %s210 = sphi 0, %s208
    %s211 = sphi 0, %s210
    %s225 = sphi 0, %s211
    %s233 = sphi 0, %s235
    %s236 = sphi 0, %s233
    %s237 = sphi 0, %s236
    %s253 = sphi 0, %s237
  $region4: #{network_wrapper_forward.1} parent=0 // loop_header_branch
    %18 = sbr.rel (%p16) target = $region8
  $region5: #{network_wrapper_forward.1} parent=0 // loop_body
    %s20 = ssub.s32 %s15, 1
    %s21 = ssub.s32 %s15, 2
    %s28 = sadd.s32 1, %s23
    %p29 = scmp.ge.s32.totalorder %s28, 3
    %s30 = scalar_select %p29, 0, %s28
    %s31 = sadd.s32 1, %s22
    %s32 = scalar_select %p29, %s31, %s22
    %p33 = scmp.ge.s32.totalorder %s32, 2
    %s34 = scalar_select %p33, 0, %s32
    %s35 = ssub.s32 %s22, %s34
    %p36 = scmp.eq.s32.totalorder %s35, 0
    %s38 = sadd.s32 %s37, 1
    %s39 = scalar_select %p36, %s37, %s38
    %p42 = pneg %p36
    %p43 = scmp.eq.s32.totalorder %s15, 5
    %p44 = por %p42, %p43
    %p45 = scmp.ne.s32.totalorder %s37, %s40
    %p46 = scmp.eq.s32.totalorder %s15, 0
    %p47 = por %p45, %p46
    %p48 = scmp.ne.s32.totalorder %s37, %s40
    %p49 = scmp.eq.s32.totalorder %s20, 5
    %p50 = por %p48, %p49
    %p51 = scmp.ne.s32.totalorder %s40, %s41
    %p52 = scmp.eq.s32.totalorder %s20, 0
    %p53 = por %p51, %p52
    %p54 = scmp.ne.s32.totalorder %s40, %s41
    %p55 = scmp.eq.s32.totalorder %s21, 5
    %p56 = por %p54, %p55
    %p58 = scmp.ne.s32.totalorder %s41, %s57
    %p59 = scmp.eq.s32.totalorder %s21, 0
    %p60 = por %p58, %p59
    %s62 = sadd.s32 %s61, 1
    %p65 = scmp.eq.s32.totalorder %s15, 5
    %p66 = scmp.ne.s32.totalorder %s61, %s63
    %p67 = scmp.eq.s32.totalorder %s15, 0
    %p68 = por %p66, %p67
    %p69 = scmp.ne.s32.totalorder %s61, %s63
    %p70 = scmp.eq.s32.totalorder %s20, 5
    %p71 = por %p69, %p70
    %p72 = scmp.ne.s32.totalorder %s63, %s64
    %p73 = scmp.eq.s32.totalorder %s20, 0
    %p74 = por %p72, %p73
    %p75 = scmp.ne.s32.totalorder %s63, %s64
    %p76 = scmp.eq.s32.totalorder %s21, 5
    %p77 = por %p75, %p76
    %p79 = scmp.ne.s32.totalorder %s64, %s78
    %p80 = scmp.eq.s32.totalorder %s21, 0
    %p81 = por %p79, %p80
    %s83 = sadd.s32 %s82, 1
    %p86 = scmp.eq.s32.totalorder %s15, 5
    %p87 = scmp.ne.s32.totalorder %s82, %s84
    %p88 = scmp.eq.s32.totalorder %s15, 0
    %p89 = por %p87, %p88
    %p90 = scmp.ne.s32.totalorder %s82, %s84
    %p91 = scmp.eq.s32.totalorder %s20, 5
    %p92 = por %p90, %p91
    %p93 = scmp.ne.s32.totalorder %s84, %s85
    %p94 = scmp.eq.s32.totalorder %s20, 0
    %p95 = por %p93, %p94
    %p96 = scmp.ne.s32.totalorder %s84, %s85
    %p97 = scmp.eq.s32.totalorder %s21, 5
    %p98 = por %p96, %p97
    %p100 = scmp.ne.s32.totalorder %s85, %s99
    %p101 = scmp.eq.s32.totalorder %s21, 0
    %p102 = por %p100, %p101
    %s104 = sadd.s32 %s103, 1
    %p107 = scmp.eq.s32.totalorder %s15, 5
    %p108 = scmp.ne.s32.totalorder %s103, %s105
    %p109 = scmp.eq.s32.totalorder %s15, 0
    %p110 = por %p108, %p109
    %p111 = scmp.ne.s32.totalorder %s103, %s105
    %p112 = scmp.eq.s32.totalorder %s20, 5
    %p113 = por %p111, %p112
    %p114 = scmp.ne.s32.totalorder %s105, %s106
    %p115 = scmp.eq.s32.totalorder %s20, 0
    %p116 = por %p114, %p115
    %p117 = scmp.ne.s32.totalorder %s105, %s106
    %p118 = scmp.eq.s32.totalorder %s21, 5
    %p119 = por %p117, %p118
    %p121 = scmp.ne.s32.totalorder %s106, %s120
    %p122 = scmp.eq.s32.totalorder %s21, 0
    %p123 = por %p121, %p122
    %s125 = sadd.s32 %s124, 1
    %p128 = scmp.eq.s32.totalorder %s15, 5
    %p129 = scmp.ne.s32.totalorder %s124, %s126
    %p130 = scmp.eq.s32.totalorder %s15, 0
    %p131 = por %p129, %p130
    %p132 = scmp.ne.s32.totalorder %s124, %s126
    %p133 = scmp.eq.s32.totalorder %s20, 5
    %p134 = por %p132, %p133
    %p135 = scmp.ne.s32.totalorder %s126, %s127
    %p136 = scmp.eq.s32.totalorder %s20, 0
    %p137 = por %p135, %p136
    %p138 = scmp.ne.s32.totalorder %s126, %s127
    %p139 = scmp.eq.s32.totalorder %s21, 5
    %p140 = por %p138, %p139
    %p142 = scmp.ne.s32.totalorder %s127, %s141
    %p143 = scmp.eq.s32.totalorder %s21, 0
    %p144 = por %p142, %p143
    %s146 = sadd.s32 %s145, 1
    %p149 = scmp.eq.s32.totalorder %s15, 5
    %p150 = scmp.ne.s32.totalorder %s145, %s147
    %p151 = scmp.eq.s32.totalorder %s15, 0
    %p152 = por %p150, %p151
    %p153 = scmp.ne.s32.totalorder %s145, %s147
    %p154 = scmp.eq.s32.totalorder %s20, 5
    %p155 = por %p153, %p154
    %p156 = scmp.ne.s32.totalorder %s147, %s148
    %p157 = scmp.eq.s32.totalorder %s20, 0
    %p158 = por %p156, %p157
    %p159 = scmp.ne.s32.totalorder %s147, %s148
    %p160 = scmp.eq.s32.totalorder %s21, 5
    %p161 = por %p159, %p160
    %p163 = scmp.ne.s32.totalorder %s148, %s162
    %p164 = scmp.eq.s32.totalorder %s21, 0
    %p165 = por %p163, %p164
    %s167 = sadd.s32 %s166, 1
    %p170 = scmp.eq.s32.totalorder %s15, 5
    %p171 = scmp.ne.s32.totalorder %s166, %s168
    %p172 = scmp.eq.s32.totalorder %s15, 0
    %p173 = por %p171, %p172
    %p174 = scmp.ne.s32.totalorder %s166, %s168
    %p175 = scmp.eq.s32.totalorder %s20, 5
    %p176 = por %p174, %p175
    %p177 = scmp.ne.s32.totalorder %s168, %s169
    %p178 = scmp.eq.s32.totalorder %s20, 0
    %p179 = por %p177, %p178
    %p180 = scmp.ne.s32.totalorder %s168, %s169
    %p181 = scmp.eq.s32.totalorder %s21, 5
    %p182 = por %p180, %p181
    %p184 = scmp.ne.s32.totalorder %s169, %s183
    %p185 = scmp.eq.s32.totalorder %s21, 0
    %p186 = por %p184, %p185
    %s188 = sadd.s32 %s187, 1
    %p191 = scmp.eq.s32.totalorder %s15, 5
    %p192 = scmp.ne.s32.totalorder %s187, %s189
    %p193 = scmp.eq.s32.totalorder %s15, 0
    %p194 = por %p192, %p193
    %p195 = scmp.ne.s32.totalorder %s187, %s189
    %p196 = scmp.eq.s32.totalorder %s20, 5
    %p197 = por %p195, %p196
    %p198 = scmp.ne.s32.totalorder %s189, %s190
    %p199 = scmp.eq.s32.totalorder %s20, 0
    %p200 = por %p198, %p199
    %p201 = scmp.ne.s32.totalorder %s189, %s190
    %p202 = scmp.eq.s32.totalorder %s21, 5
    %p203 = por %p201, %p202
    %p205 = scmp.ne.s32.totalorder %s190, %s204
    %p206 = scmp.eq.s32.totalorder %s21, 0
    %p207 = por %p205, %p206
    %s209 = sadd.s32 %s208, 1
    %p212 = scmp.eq.s32.totalorder %s15, 5
    %p213 = scmp.ne.s32.totalorder %s208, %s210
    %p214 = scmp.eq.s32.totalorder %s15, 0
    %p215 = por %p213, %p214
    %p216 = scmp.ne.s32.totalorder %s208, %s210
    %p217 = scmp.eq.s32.totalorder %s20, 5
    %p218 = por %p216, %p217
    %p219 = scmp.ne.s32.totalorder %s210, %s211
    %p220 = scmp.eq.s32.totalorder %s20, 0
    %p221 = por %p219, %p220
    %p222 = scmp.ne.s32.totalorder %s210, %s211
    %p223 = scmp.eq.s32.totalorder %s21, 5
    %p224 = por %p222, %p223
    %p226 = scmp.ne.s32.totalorder %s211, %s225
    %p227 = scmp.eq.s32.totalorder %s21, 0
    %p228 = por %p226, %p227
    %s229 = ssub.s32 %s22, %s34
    %s230 = ssub.s32 %s23, %s30
    %s231 = sor.u32 %s229, %s230
    %p232 = scmp.eq.s32.totalorder %s231, 0
    %s234 = sadd.s32 %s233, 1
    %s235 = scalar_select %p232, %s233, %s234
    %p238 = pneg %p232
    %p239 = scmp.eq.s32.totalorder %s15, 5
    %p240 = por %p238, %p239
    %p241 = scmp.ne.s32.totalorder %s233, %s236
    %p242 = scmp.eq.s32.totalorder %s15, 0
    %p243 = por %p241, %p242
    %p244 = scmp.ne.s32.totalorder %s233, %s236
    %p245 = scmp.eq.s32.totalorder %s20, 5
    %p246 = por %p244, %p245
    %p247 = scmp.ne.s32.totalorder %s236, %s237
    %p248 = scmp.eq.s32.totalorder %s20, 0
    %p249 = por %p247, %p248
    %p250 = scmp.ne.s32.totalorder %s236, %s237
    %p251 = scmp.eq.s32.totalorder %s21, 5
    %p252 = por %p250, %p251
    %p254 = scmp.ne.s32.totalorder %s237, %s253
    %p255 = scmp.eq.s32.totalorder %s21, 0
    %p256 = por %p254, %p255
    %p257 = scmp.le.s32.totalorder 1, %s15
    %p258 = scmp.lt.s32.totalorder %s15, 7
    %p259 = pnand %p257, %p258
    %p260 = pneg %p259
    // Predicated region
    $region9: #{network_wrapper_forward.1} parent=5 // pred_check
      _
    $region10: #{network_wrapper_forward.1} parent=5 // pred_check_branch
      %262 = sbr.rel (%p259) target = $region12
    $region11: #{network_wrapper_forward.1} parent=5 // pred_region
      %s263 = ssub.s32 %s15, 1
      // Predicated region
      $region13: #{network_wrapper_forward.1} parent=11 // pred_check
        %p264 = pneg %p74
      $region14: #{network_wrapper_forward.1} parent=11 // pred_check_branch
        %266 = sbr.rel (%p264) target = $region16
      $region15: #{network_wrapper_forward.1} parent=11 // pred_region
        _
      $region16: #{network_wrapper_forward.1} parent=11 // pred_fallthru
        _
      // Predicated region
      $region17: #{network_wrapper_forward.1} parent=11 // pred_check
        %p267 = pneg %p95
      $region18: #{network_wrapper_forward.1} parent=11 // pred_check_branch
        %269 = sbr.rel (%p267) target = $region20
      $region19: #{network_wrapper_forward.1} parent=11 // pred_region
        _
      $region20: #{network_wrapper_forward.1} parent=11 // pred_fallthru
        _
      // Predicated region
      $region21: #{network_wrapper_forward.1} parent=11 // pred_check
        %p270 = pneg %p116
      $region22: #{network_wrapper_forward.1} parent=11 // pred_check_branch
        %272 = sbr.rel (%p270) target = $region24
      $region23: #{network_wrapper_forward.1} parent=11 // pred_region
        _
      $region24: #{network_wrapper_forward.1} parent=11 // pred_fallthru
        _
      // Predicated region
      $region25: #{network_wrapper_forward.1} parent=11 // pred_check
        %p273 = pneg %p137
      $region26: #{network_wrapper_forward.1} parent=11 // pred_check_branch
        %275 = sbr.rel (%p273) target = $region28
      $region27: #{network_wrapper_forward.1} parent=11 // pred_region
        _
      $region28: #{network_wrapper_forward.1} parent=11 // pred_fallthru
        _
      // Predicated region
      $region29: #{network_wrapper_forward.1} parent=11 // pred_check
        %p276 = pneg %p158
      $region30: #{network_wrapper_forward.1} parent=11 // pred_check_branch
        %278 = sbr.rel (%p276) target = $region32
      $region31: #{network_wrapper_forward.1} parent=11 // pred_region
        _
      $region32: #{network_wrapper_forward.1} parent=11 // pred_fallthru
        _
      // Predicated region
      $region33: #{network_wrapper_forward.1} parent=11 // pred_check
        %p279 = pneg %p179
      $region34: #{network_wrapper_forward.1} parent=11 // pred_check_branch
        %281 = sbr.rel (%p279) target = $region36
      $region35: #{network_wrapper_forward.1} parent=11 // pred_region
        _
      $region36: #{network_wrapper_forward.1} parent=11 // pred_fallthru
        _
      // Predicated region
      $region37: #{network_wrapper_forward.1} parent=11 // pred_check
        %p282 = pneg %p200
      $region38: #{network_wrapper_forward.1} parent=11 // pred_check_branch
        %284 = sbr.rel (%p282) target = $region40
      $region39: #{network_wrapper_forward.1} parent=11 // pred_region
        _
      $region40: #{network_wrapper_forward.1} parent=11 // pred_fallthru
        _
      // Predicated region
      $region41: #{network_wrapper_forward.1} parent=11 // pred_check
        %p285 = pneg %p221
      $region42: #{network_wrapper_forward.1} parent=11 // pred_check_branch
        %287 = sbr.rel (%p285) target = $region44
      $region43: #{network_wrapper_forward.1} parent=11 // pred_region
        _
      $region44: #{network_wrapper_forward.1} parent=11 // pred_fallthru
        _
    $region12: #{network_wrapper_forward.1} parent=5 // pred_fallthru
      _
    %p288 = scmp.lt.s32.totalorder %s15, 6
    // Predicated region
    $region45: #{network_wrapper_forward.1} parent=5 // pred_check
      %p289 = pneg %p288
    $region46: #{network_wrapper_forward.1} parent=5 // pred_check_branch
      %291 = sbr.rel (%p289) target = $region48
    $region47: #{network_wrapper_forward.1} parent=5 // pred_region
      // Predicated region
      $region49: #{network_wrapper_forward.1} parent=47 // pred_check
        %p292 = pneg %p47
      $region50: #{network_wrapper_forward.1} parent=47 // pred_check_branch
        %294 = sbr.rel (%p292) target = $region52
      $region51: #{network_wrapper_forward.1} parent=47 // pred_region
        %p295 = scmp.lt.s32.totalorder %s22, 1
        %s296 = scalar_select %p295, %s22, 1
        %s297 = smul.addr %s296, 4
        %s298 = scalar_lea.vmem %s0, %s297
      $region52: #{network_wrapper_forward.1} parent=47 // pred_fallthru
        _
    $region48: #{network_wrapper_forward.1} parent=5 // pred_fallthru
      _
    %p299 = scmp.le.s32.totalorder 1, %s15
    %p300 = scmp.lt.s32.totalorder %s15, 7
    %p301 = pnand %p299, %p300
    %p302 = pneg %p301
    // Predicated region
    $region53: #{network_wrapper_forward.1} parent=5 // pred_check
      _
    $region54: #{network_wrapper_forward.1} parent=5 // pred_check_branch
      %304 = sbr.rel (%p301) target = $region56
    $region55: #{network_wrapper_forward.1} parent=5 // pred_region
      %s305 = ssub.s32 %s15, 1
      %p306 = scmp.lt.s32.totalorder %s24, 1
      %s307 = scalar_select %p306, %s24, 1
      %s308 = smul.addr %s307, 4
      %s309 = scalar_lea.vmem %s0, %s308
      %p310 = pneg %p53
      %p311 = pneg %p50
      %p312 = pneg %p74
      %p313 = pneg %p71
      %p314 = pneg %p95
      %p315 = pneg %p92
      %p316 = pneg %p116
      %p317 = pneg %p113
      %p318 = pneg %p137
      %p319 = pneg %p134
      %p320 = pneg %p158
      %p321 = pneg %p155
      %p322 = pneg %p179
      %p323 = pneg %p176
      %p324 = pneg %p200
      %p325 = pneg %p197
      %p326 = pneg %p221
      %p327 = pneg %p218
      %p328 = pneg %p249
      %p329 = pneg %p246
      %p330 = scmp.lt.s32.totalorder %s24, 1
      %s331 = scalar_select %p330, %s24, 1
      %p332 = scmp.lt.s32.totalorder %s25, 2
      %s333 = scalar_select %p332, %s25, 2
      %s334 = smul.addr %s331, 3
      %s335 = sadd.s32 %s333, %s334
      %s336 = smul.addr %s335, 2
      %s337 = scalar_lea.vmem %s9, %s336
      %p338 = scmp.lt.s32.totalorder %s24, 1
      %s339 = scalar_select %p338, %s24, 1
      %s340 = smul.addr %s339, 4
      %s341 = scalar_lea.vmem %s0, %s340
      %p342 = scmp.lt.s32.totalorder %s24, 1
      %s343 = scalar_select %p342, %s24, 1
      %p344 = scmp.lt.s32.totalorder %s25, 2
      %s345 = scalar_select %p344, %s25, 2
      %s346 = smul.addr %s343, 3
      %s347 = sadd.s32 %s345, %s346
      %s348 = smul.addr %s347, 2
      %s349 = scalar_lea.vmem %s9, %s348
      %s351 = smul.u32 %s25, 128
      %s352 = sshra.s32 %s351, 7
      %s353 = sand.u32 %s351, 127
      %s354 = scalar_lea.vmem %s341, %s352
      %v355 = vld [vmem:[%s354] sm:$0x3]
      %v356 = vld [vmem:[%s1] sm:$0xff]
      %v357 = vld [vmem:[%s1 + $0x8] sm:$0xff]
      %v358 = vld [vmem:[%s1 + $0x10] sm:$0xff]
      %v359 = vld [vmem:[%s1 + $0x18] sm:$0xff]
      %361 = vset.pattern.permute.xlu0 0
      %362 = vperm.xlu0 %361, %v356
      %v363 = vpop.permute.xlu0 %362
      %366 = vset.pattern.permute.xlu0 0
      %367 = vperm.xlu0 %366, %v357
      %v368 = vpop.permute.xlu0 %367
      %371 = vset.pattern.permute.xlu0 0
      %372 = vperm.xlu0 %371, %v358
      %v373 = vpop.permute.xlu0 %372
      %376 = vset.pattern.permute.xlu0 0
      %377 = vperm.xlu0 %376, %v359
      %v378 = vpop.permute.xlu0 %377
      %v381 = vlaneseq
      %v382 = vshrl.u32 %v381, 7
      %v383 = vsub.s32 0, %v382
      %v384 = vrot.slane %v355, %v383
      %v386 = vmul.f32 %v363, %v384
      %v387 = vmul.f32 %v368, %v384
      %v388 = vmul.f32 %v373, %v384
      %v389 = vmul.f32 %v378, %v384
      %v390 = vadd.f32 %v386, 0.0
      %v391 = vadd.f32 %v387, 0.0
      %v392 = vadd.f32 %v388, 0.0
      %v393 = vadd.f32 %v389, 0.0
      %394 = vset.pattern.permute.xlu0 1
      %395 = vperm.xlu0 %394, %v356
      %v396 = vpop.permute.xlu0 %395
      %398 = vset.pattern.permute.xlu0 1
      %399 = vperm.xlu0 %398, %v357
      %v400 = vpop.permute.xlu0 %399
      %402 = vset.pattern.permute.xlu0 1
      %403 = vperm.xlu0 %402, %v358
      %v404 = vpop.permute.xlu0 %403
      %406 = vset.pattern.permute.xlu0 1
      %407 = vperm.xlu0 %406, %v359
      %v408 = vpop.permute.xlu0 %407
      %v410 = vlaneseq
      %v411 = vshrl.u32 %v410, 7
      %v412 = vsub.s32 1, %v411
      %v413 = vrot.slane %v355, %v412
      %v415 = vmul.f32 %v396, %v384
      %v416 = vmul.f32 %v396, %v413
      %v417 = vmul.f32 %v400, %v384
      %v418 = vmul.f32 %v400, %v413
      %v419 = vmul.f32 %v404, %v384
      %v420 = vmul.f32 %v404, %v413
      %v421 = vmul.f32 %v408, %v384
      %v422 = vmul.f32 %v408, %v413
      %431 = vrot.lane.b32.xlu0 %v415, 127
      %v432 = vpop.permute.xlu0 %431
      %433 = vrot.lane.b32.xlu0 %v416, 127
      %v434 = vpop.permute.xlu0 %433
      %435 = vrot.lane.b32.xlu0 %v417, 127
      %v436 = vpop.permute.xlu0 %435
      %437 = vrot.lane.b32.xlu0 %v418, 127
      %v438 = vpop.permute.xlu0 %437
      %439 = vrot.lane.b32.xlu0 %v419, 127
      %v440 = vpop.permute.xlu0 %439
      %441 = vrot.lane.b32.xlu0 %v420, 127
      %v442 = vpop.permute.xlu0 %441
      %443 = vrot.lane.b32.xlu0 %v421, 127
      %v444 = vpop.permute.xlu0 %443
      %445 = vrot.lane.b32.xlu0 %v422, 127
      %v446 = vpop.permute.xlu0 %445
      %vm447 = vcmask 1039360
      %v448 = vsel %vm447, %v432, %v434
      %v449 = vsel %vm447, %v436, %v438
      %v450 = vsel %vm447, %v440, %v442
      %v451 = vsel %vm447, %v444, %v446
      %v456 = vadd.f32 %v390, %v448
      %v457 = vadd.f32 %v391, %v449
      %v458 = vadd.f32 %v392, %v450
      %v459 = vadd.f32 %v393, %v451
      %460 = vset.pattern.permute.xlu0 2
      %461 = vperm.xlu0 %460, %v356
      %v462 = vpop.permute.xlu0 %461
      %464 = vset.pattern.permute.xlu0 2
      %465 = vperm.xlu0 %464, %v357
      %v466 = vpop.permute.xlu0 %465
      %468 = vset.pattern.permute.xlu0 2
      %469 = vperm.xlu0 %468, %v358
      %v470 = vpop.permute.xlu0 %469
      %472 = vset.pattern.permute.xlu0 2
      %473 = vperm.xlu0 %472, %v359
      %v474 = vpop.permute.xlu0 %473
      %v476 = vmul.f32 %v462, %v384
      %v477 = vmul.f32 %v462, %v413
      %v478 = vmul.f32 %v466, %v384
      %v479 = vmul.f32 %v466, %v413
      %v480 = vmul.f32 %v470, %v384
      %v481 = vmul.f32 %v470, %v413
      %v482 = vmul.f32 %v474, %v384
      %v483 = vmul.f32 %v474, %v413
      %492 = vrot.lane.b32.xlu0 %v476, 126
      %v493 = vpop.permute.xlu0 %492
      %494 = vrot.lane.b32.xlu0 %v477, 126
      %v495 = vpop.permute.xlu0 %494
      %496 = vrot.lane.b32.xlu0 %v478, 126
      %v497 = vpop.permute.xlu0 %496
      %498 = vrot.lane.b32.xlu0 %v479, 126
      %v499 = vpop.permute.xlu0 %498
      %500 = vrot.lane.b32.xlu0 %v480, 126
      %v501 = vpop.permute.xlu0 %500
      %502 = vrot.lane.b32.xlu0 %v481, 126
      %v503 = vpop.permute.xlu0 %502
      %504 = vrot.lane.b32.xlu0 %v482, 126
      %v505 = vpop.permute.xlu0 %504
      %506 = vrot.lane.b32.xlu0 %v483, 126
      %v507 = vpop.permute.xlu0 %506
      %vm508 = vcmask 1031168
      %v509 = vsel %vm508, %v493, %v495
      %v510 = vsel %vm508, %v497, %v499
      %v511 = vsel %vm508, %v501, %v503
      %v512 = vsel %vm508, %v505, %v507
      %v517 = vadd.f32 %v456, %v509
      %v518 = vadd.f32 %v457, %v510
      %v519 = vadd.f32 %v458, %v511
      %v520 = vadd.f32 %v459, %v512
      %521 = vset.pattern.permute.xlu0 3
      %522 = vperm.xlu0 %521, %v356
      %v523 = vpop.permute.xlu0 %522
      %525 = vset.pattern.permute.xlu0 3
      %526 = vperm.xlu0 %525, %v357
      %v527 = vpop.permute.xlu0 %526
      %529 = vset.pattern.permute.xlu0 3
      %530 = vperm.xlu0 %529, %v358
      %v531 = vpop.permute.xlu0 %530
      %533 = vset.pattern.permute.xlu0 3
      %534 = vperm.xlu0 %533, %v359
      %v535 = vpop.permute.xlu0 %534
      %v537 = vmul.f32 %v523, %v384
      %v538 = vmul.f32 %v523, %v413
      %v539 = vmul.f32 %v527, %v384
      %v540 = vmul.f32 %v527, %v413
      %v541 = vmul.f32 %v531, %v384
      %v542 = vmul.f32 %v531, %v413
      %v543 = vmul.f32 %v535, %v384
      %v544 = vmul.f32 %v535, %v413
      %553 = vrot.lane.b32.xlu0 %v537, 125
      %v554 = vpop.permute.xlu0 %553
      %555 = vrot.lane.b32.xlu0 %v538, 125
      %v556 = vpop.permute.xlu0 %555
      %557 = vrot.lane.b32.xlu0 %v539, 125
      %v558 = vpop.permute.xlu0 %557
      %559 = vrot.lane.b32.xlu0 %v540, 125
      %v560 = vpop.permute.xlu0 %559
      %561 = vrot.lane.b32.xlu0 %v541, 125
      %v562 = vpop.permute.xlu0 %561
      %563 = vrot.lane.b32.xlu0 %v542, 125
      %v564 = vpop.permute.xlu0 %563
      %565 = vrot.lane.b32.xlu0 %v543, 125
      %v566 = vpop.permute.xlu0 %565
      %567 = vrot.lane.b32.xlu0 %v544, 125
      %v568 = vpop.permute.xlu0 %567
      %vm569 = vcmask 1022976
      %v570 = vsel %vm569, %v554, %v556
      %v571 = vsel %vm569, %v558, %v560
      %v572 = vsel %vm569, %v562, %v564
      %v573 = vsel %vm569, %v566, %v568
      %v578 = vadd.f32 %v517, %v570
      %v579 = vadd.f32 %v518, %v571
      %v580 = vadd.f32 %v519, %v572
      %v581 = vadd.f32 %v520, %v573
      %582 = vset.pattern.permute.xlu0 4
      %583 = vperm.xlu0 %582, %v356
      %v584 = vpop.permute.xlu0 %583
      %586 = vset.pattern.permute.xlu0 4
      %587 = vperm.xlu0 %586, %v357
      %v588 = vpop.permute.xlu0 %587
      %590 = vset.pattern.permute.xlu0 4
      %591 = vperm.xlu0 %590, %v358
      %v592 = vpop.permute.xlu0 %591
      %594 = vset.pattern.permute.xlu0 4
      %595 = vperm.xlu0 %594, %v359
      %v596 = vpop.permute.xlu0 %595
      %v598 = vmul.f32 %v584, %v384
      %v599 = vmul.f32 %v584, %v413
      %v600 = vmul.f32 %v588, %v384
      %v601 = vmul.f32 %v588, %v413
      %v602 = vmul.f32 %v592, %v384
      %v603 = vmul.f32 %v592, %v413
      %v604 = vmul.f32 %v596, %v384
      %v605 = vmul.f32 %v596, %v413
      %614 = vrot.lane.b32.xlu0 %v598, 124
      %v615 = vpop.permute.xlu0 %614
      %616 = vrot.lane.b32.xlu0 %v599, 124
      %v617 = vpop.permute.xlu0 %616
      %618 = vrot.lane.b32.xlu0 %v600, 124
      %v619 = vpop.permute.xlu0 %618
      %620 = vrot.lane.b32.xlu0 %v601, 124
      %v621 = vpop.permute.xlu0 %620
      %622 = vrot.lane.b32.xlu0 %v602, 124
      %v623 = vpop.permute.xlu0 %622
      %624 = vrot.lane.b32.xlu0 %v603, 124
      %v625 = vpop.permute.xlu0 %624
      %626 = vrot.lane.b32.xlu0 %v604, 124
      %v627 = vpop.permute.xlu0 %626
      %628 = vrot.lane.b32.xlu0 %v605, 124
      %v629 = vpop.permute.xlu0 %628
      %vm630 = vcmask 1014784
      %v631 = vsel %vm630, %v615, %v617
      %v632 = vsel %vm630, %v619, %v621
      %v633 = vsel %vm630, %v623, %v625
      %v634 = vsel %vm630, %v627, %v629
      %v639 = vadd.f32 %v578, %v631
      %v640 = vadd.f32 %v579, %v632
      %v641 = vadd.f32 %v580, %v633
      %v642 = vadd.f32 %v581, %v634
      %643 = vset.pattern.permute.xlu0 5
      %644 = vperm.xlu0 %643, %v356
      %v645 = vpop.permute.xlu0 %644
      %647 = vset.pattern.permute.xlu0 5
      %648 = vperm.xlu0 %647, %v357
      %v649 = vpop.permute.xlu0 %648
      %651 = vset.pattern.permute.xlu0 5
      %652 = vperm.xlu0 %651, %v358
      %v653 = vpop.permute.xlu0 %652
      %655 = vset.pattern.permute.xlu0 5
      %656 = vperm.xlu0 %655, %v359
      %v657 = vpop.permute.xlu0 %656
      %v659 = vmul.f32 %v645, %v384
      %v660 = vmul.f32 %v645, %v413
      %v661 = vmul.f32 %v649, %v384
      %v662 = vmul.f32 %v649, %v413
      %v663 = vmul.f32 %v653, %v384
      %v664 = vmul.f32 %v653, %v413
      %v665 = vmul.f32 %v657, %v384
      %v666 = vmul.f32 %v657, %v413
      %675 = vrot.lane.b32.xlu0 %v659, 123
      %v676 = vpop.permute.xlu0 %675
      %677 = vrot.lane.b32.xlu0 %v660, 123
      %v678 = vpop.permute.xlu0 %677
      %679 = vrot.lane.b32.xlu0 %v661, 123
      %v680 = vpop.permute.xlu0 %679
      %681 = vrot.lane.b32.xlu0 %v662, 123
      %v682 = vpop.permute.xlu0 %681
      %683 = vrot.lane.b32.xlu0 %v663, 123
      %v684 = vpop.permute.xlu0 %683
      %685 = vrot.lane.b32.xlu0 %v664, 123
      %v686 = vpop.permute.xlu0 %685
      %687 = vrot.lane.b32.xlu0 %v665, 123
      %v688 = vpop.permute.xlu0 %687
      %689 = vrot.lane.b32.xlu0 %v666, 123
      %v690 = vpop.permute.xlu0 %689
      %vm691 = vcmask 1006592
      %v692 = vsel %vm691, %v676, %v678
      %v693 = vsel %vm691, %v680, %v682
      %v694 = vsel %vm691, %v684, %v686
      %v695 = vsel %vm691, %v688, %v690
      %v700 = vadd.f32 %v639, %v692
      %v701 = vadd.f32 %v640, %v693
      %v702 = vadd.f32 %v641, %v694
      %v703 = vadd.f32 %v642, %v695
      %704 = vset.pattern.permute.xlu0 6
      %705 = vperm.xlu0 %704, %v356
      %v706 = vpop.permute.xlu0 %705
      %708 = vset.pattern.permute.xlu0 6
      %709 = vperm.xlu0 %708, %v357
      %v710 = vpop.permute.xlu0 %709
      %712 = vset.pattern.permute.xlu0 6
      %713 = vperm.xlu0 %712, %v358
      %v714 = vpop.permute.xlu0 %713
      %716 = vset.pattern.permute.xlu0 6
      %717 = vperm.xlu0 %716, %v359
      %v718 = vpop.permute.xlu0 %717
      %v720 = vmul.f32 %v706, %v384
      %v721 = vmul.f32 %v706, %v413
      %v722 = vmul.f32 %v710, %v384
      %v723 = vmul.f32 %v710, %v413
      %v724 = vmul.f32 %v714, %v384
      %v725 = vmul.f32 %v714, %v413
      %v726 = vmul.f32 %v718, %v384
      %v727 = vmul.f32 %v718, %v413
      %736 = vrot.lane.b32.xlu0 %v720, 122
      %v737 = vpop.permute.xlu0 %736
      %738 = vrot.lane.b32.xlu0 %v721, 122
      %v739 = vpop.permute.xlu0 %738
      %740 = vrot.lane.b32.xlu0 %v722, 122
      %v741 = vpop.permute.xlu0 %740
      %742 = vrot.lane.b32.xlu0 %v723, 122
      %v743 = vpop.permute.xlu0 %742
      %744 = vrot.lane.b32.xlu0 %v724, 122
      %v745 = vpop.permute.xlu0 %744
      %746 = vrot.lane.b32.xlu0 %v725, 122
      %v747 = vpop.permute.xlu0 %746
      %748 = vrot.lane.b32.xlu0 %v726, 122
      %v749 = vpop.permute.xlu0 %748
      %750 = vrot.lane.b32.xlu0 %v727, 122
      %v751 = vpop.permute.xlu0 %750
      %vm752 = vcmask 998400
      %v753 = vsel %vm752, %v737, %v739
      %v754 = vsel %vm752, %v741, %v743
      %v755 = vsel %vm752, %v745, %v747
      %v756 = vsel %vm752, %v749, %v751
      %v761 = vadd.f32 %v700, %v753
      %v762 = vadd.f32 %v701, %v754
      %v763 = vadd.f32 %v702, %v755
      %v764 = vadd.f32 %v703, %v756
      %v765 = vld [vmem:[%s2] sm:$0xff]
      %v766 = vld [vmem:[%s2 + $0x8] sm:$0xff]
      %v767 = vld [vmem:[%s2 + $0x10] sm:$0xff]
      %v768 = vld [vmem:[%s2 + $0x18] sm:$0xff]
      %770 = vset.pattern.permute.xlu0 0
      %771 = vperm.xlu0 %770, %v765
      %v772 = vpop.permute.xlu0 %771
      %775 = vset.pattern.permute.xlu0 0
      %776 = vperm.xlu0 %775, %v766
      %v777 = vpop.permute.xlu0 %776
      %780 = vset.pattern.permute.xlu0 0
      %781 = vperm.xlu0 %780, %v767
      %v782 = vpop.permute.xlu0 %781
      %785 = vset.pattern.permute.xlu0 0
      %786 = vperm.xlu0 %785, %v768
      %v787 = vpop.permute.xlu0 %786
      %v789 = vadd.f32 %v761, %v772
      %v790 = vadd.f32 %v762, %v777
      %v791 = vadd.f32 %v763, %v782
      %v792 = vadd.f32 %v764, %v787
      %v793 = vmax.f32 %v789, 0.0
      %v794 = vmax.f32 %v790, 0.0
      %v795 = vmax.f32 %v791, 0.0
      %v796 = vmax.f32 %v792, 0.0
      %v797 = vld [vmem:[%s3] sm:$0xf]
      %v798 = vld [vmem:[%s3 + $0x4] sm:$0xf]
      %v799 = vld [vmem:[%s3 + $0x8] sm:$0xf]
      %v800 = vld [vmem:[%s3 + $0xc] sm:$0xf]
      %v801 = vpack.c.bf16 %v794, %v793
      %v802 = vpack.c.bf16 %v796, %v795
      %v803 = vld [vmem:[%s4] sm:$0xff]
      %v804 = vld [vmem:[%s4 + $0x8] sm:$0xff]
      %v805 = vld [vmem:[%s4 + $0x10] sm:$0xff]
      %v806 = vld [vmem:[%s4 + $0x18] sm:$0xff]
      %808 = vset.pattern.permute.xlu0 0
      %809 = vperm.xlu0 %808, %v803
      %v810 = vpop.permute.xlu0 %809
      %813 = vset.pattern.permute.xlu0 0
      %814 = vperm.xlu0 %813, %v804
      %v815 = vpop.permute.xlu0 %814
      %818 = vset.pattern.permute.xlu0 0
      %819 = vperm.xlu0 %818, %v805
      %v820 = vpop.permute.xlu0 %819
      %823 = vset.pattern.permute.xlu0 0
      %824 = vperm.xlu0 %823, %v806
      %v825 = vpop.permute.xlu0 %824
      %v831 = vunpack.c.l.b16 %v797
      %v832 = vunpack.c.l.b16 %v798
      %v833 = vunpack.c.l.b16 %v799
      %v834 = vunpack.c.l.b16 %v800
      %v835 = vpack.c.b16 %v832, %v831
      %v836 = vpack.c.b16 %v834, %v833
      %vm837 = vcmask 261120
      %v839 = vsel %vm837, %v835, 0
      %v842 = vsel %vm837, %v836, 0
      %844 = vmatprep.subr.bf16.mxu0 0
      %845 = vmatpush1.bf16.msra.mxu0 %v801
      %846 = vmatprep.subr.bf16.mxu0 0
      %847 = vmatpush1.bf16.msra.mxu0 %v802
      %848 = vmatprep.subr.bf16.mxu0 0
      %849 = vmatpush1.bf16.msra.mxu0 0
      %850 = vmatprep.subr.bf16.mxu0 0
      %851 = vmatpush1.bf16.msra.mxu0 0
      %852 = vmatprep.subr.bf16.mxu0 0
      %853 = vmatpush1.bf16.msra.mxu0 0
      %854 = vmatprep.subr.bf16.mxu0 0
      %855 = vmatpush1.bf16.msra.mxu0 0
      %856 = vmatprep.subr.bf16.mxu0 0
      %857 = vmatpush1.bf16.msra.mxu0 0
      %858 = vmatprep.subr.bf16.mxu0 0
      %859 = vmatpush1.bf16.msra.mxu0 0
      %860 = vmatprep.subr.bf16.mxu0 0
      %861 = vmatpush1.bf16.msra.mxu0 0
      %862 = vmatprep.subr.bf16.mxu0 0
      %863 = vmatpush1.bf16.msra.mxu0 0
      %864 = vmatprep.subr.bf16.mxu0 0
      %865 = vmatpush1.bf16.msra.mxu0 0
      %866 = vmatprep.subr.bf16.mxu0 0
      %867 = vmatpush1.bf16.msra.mxu0 0
      %868 = vmatprep.subr.bf16.mxu0 0
      %869 = vmatpush1.bf16.msra.mxu0 0
      %870 = vmatprep.subr.bf16.mxu0 0
      %871 = vmatpush1.bf16.msra.mxu0 0
      %872 = vmatprep.subr.bf16.mxu0 0
      %873 = vmatpush1.bf16.msra.mxu0 0
      %874 = vmatprep.subr.bf16.mxu0 0
      %875 = vmatpush1.bf16.msra.mxu0 0
      %876 = vmatprep.mubr.bf16.mxu0 0
      %877 = vmatmul.mubr.bf16.gmra.mrb[0].mxu0 %v839
      %v878 = vpop.f32.mrb[0].mxu0
      %v879 = vadd.f32 %v810, %v878
      %v880 = vpop.f32.mrb[0].mxu0
      %v881 = vpop.f32.mrb[0].mxu0
      %v882 = vadd.f32 %v815, %v881
      %v883 = vpop.f32.mrb[0].mxu0
      %884 = vmatprep.mubr.bf16.mxu0 0
      %885 = vmatmul.mubr.bf16.gmra.mrb[0].mxu0 %v842
      %v886 = vpop.f32.mrb[0].mxu0
      %v887 = vadd.f32 %v820, %v886
      %v888 = vpop.f32.mrb[0].mxu0
      %v889 = vpop.f32.mrb[0].mxu0
      %v890 = vadd.f32 %v825, %v889
      %v891 = vpop.f32.mrb[0].mxu0
      %892 = vdwg.mxu0
      %v893 = vmax.f32 %v879, 0.0
      %v894 = vmax.f32 %v882, 0.0
      %v895 = vmax.f32 %v887, 0.0
      %v896 = vmax.f32 %v890, 0.0
      %v897 = vld [vmem:[%s5] sm:$0xf]
      %v898 = vld [vmem:[%s5 + $0x4] sm:$0xf]
      %v899 = vld [vmem:[%s5 + $0x8] sm:$0xf]
      %v900 = vld [vmem:[%s5 + $0xc] sm:$0xf]
      %v901 = vld [vmem:[%s5 + $0x10] sm:$0xf]
      %v902 = vld [vmem:[%s5 + $0x14] sm:$0xf]
      %v903 = vld [vmem:[%s5 + $0x18] sm:$0xf]
      %v904 = vld [vmem:[%s5 + $0x1c] sm:$0xf]
      %v905 = vpack.c.bf16 %v894, %v893
      %v906 = vpack.c.bf16 %v896, %v895
      %v907 = vld [vmem:[%s6] sm:$0xff]
      %v908 = vld [vmem:[%s6 + $0x8] sm:$0xff]
      %v909 = vld [vmem:[%s6 + $0x10] sm:$0xff]
      %v910 = vld [vmem:[%s6 + $0x18] sm:$0xff]
      %v911 = vld [vmem:[%s6 + $0x20] sm:$0xff]
      %v912 = vld [vmem:[%s6 + $0x28] sm:$0xff]
      %v913 = vld [vmem:[%s6 + $0x30] sm:$0xff]
      %v914 = vld [vmem:[%s6 + $0x38] sm:$0xff]
      %916 = vset.pattern.permute.xlu0 0
      %917 = vperm.xlu0 %916, %v907
      %v918 = vpop.permute.xlu0 %917
      %921 = vset.pattern.permute.xlu0 0
      %922 = vperm.xlu0 %921, %v908
      %v923 = vpop.permute.xlu0 %922
      %926 = vset.pattern.permute.xlu0 0
      %927 = vperm.xlu0 %926, %v909
      %v928 = vpop.permute.xlu0 %927
      %931 = vset.pattern.permute.xlu0 0
      %932 = vperm.xlu0 %931, %v910
      %v933 = vpop.permute.xlu0 %932
      %936 = vset.pattern.permute.xlu0 0
      %937 = vperm.xlu0 %936, %v911
      %v938 = vpop.permute.xlu0 %937
      %941 = vset.pattern.permute.xlu0 0
      %942 = vperm.xlu0 %941, %v912
      %v943 = vpop.permute.xlu0 %942
      %946 = vset.pattern.permute.xlu0 0
      %947 = vperm.xlu0 %946, %v913
      %v948 = vpop.permute.xlu0 %947
      %951 = vset.pattern.permute.xlu0 0
      %952 = vperm.xlu0 %951, %v914
      %v953 = vpop.permute.xlu0 %952
      %v963 = vunpack.c.l.b16 %v897
      %v964 = vunpack.c.l.b16 %v898
      %v965 = vunpack.c.l.b16 %v899
      %v966 = vunpack.c.l.b16 %v900
      %v967 = vunpack.c.l.b16 %v901
      %v968 = vunpack.c.l.b16 %v902
      %v969 = vunpack.c.l.b16 %v903
      %v970 = vunpack.c.l.b16 %v904
      %v971 = vpack.c.b16 %v964, %v963
      %v972 = vpack.c.b16 %v966, %v965
      %v973 = vpack.c.b16 %v968, %v967
      %v974 = vpack.c.b16 %v970, %v969
      %v976 = vsel %vm837, %v971, 0
      %v979 = vsel %vm837, %v972, 0
      %v982 = vsel %vm837, %v973, 0
      %v985 = vsel %vm837, %v974, 0
      %987 = vmatprep.subr.bf16.mxu0 0
      %988 = vmatpush1.bf16.msra.mxu0 %v905
      %989 = vmatprep.subr.bf16.mxu0 0
      %990 = vmatpush1.bf16.msra.mxu0 %v906
      %991 = vmatprep.subr.bf16.mxu0 0
      %992 = vmatpush1.bf16.msra.mxu0 0
      %993 = vmatprep.subr.bf16.mxu0 0
      %994 = vmatpush1.bf16.msra.mxu0 0
      %995 = vmatprep.subr.bf16.mxu0 0
      %996 = vmatpush1.bf16.msra.mxu0 0
      %997 = vmatprep.subr.bf16.mxu0 0
      %998 = vmatpush1.bf16.msra.mxu0 0
      %999 = vmatprep.subr.bf16.mxu0 0
      %1000 = vmatpush1.bf16.msra.mxu0 0
      %1001 = vmatprep.subr.bf16.mxu0 0
      %1002 = vmatpush1.bf16.msra.mxu0 0
      %1003 = vmatprep.subr.bf16.mxu0 0
      %1004 = vmatpush1.bf16.msra.mxu0 0
      %1005 = vmatprep.subr.bf16.mxu0 0
      %1006 = vmatpush1.bf16.msra.mxu0 0
      %1007 = vmatprep.subr.bf16.mxu0 0
      %1008 = vmatpush1.bf16.msra.mxu0 0
      %1009 = vmatprep.subr.bf16.mxu0 0
      %1010 = vmatpush1.bf16.msra.mxu0 0
      %1011 = vmatprep.subr.bf16.mxu0 0
      %1012 = vmatpush1.bf16.msra.mxu0 0
      %1013 = vmatprep.subr.bf16.mxu0 0
      %1014 = vmatpush1.bf16.msra.mxu0 0
      %1015 = vmatprep.subr.bf16.mxu0 0
      %1016 = vmatpush1.bf16.msra.mxu0 0
      %1017 = vmatprep.subr.bf16.mxu0 0
      %1018 = vmatpush1.bf16.msra.mxu0 0
      %1019 = vmatprep.mubr.bf16.mxu0 0
      %1020 = vmatmul.mubr.bf16.gmra.mrb[0].mxu0 %v976
      %v1021 = vpop.f32.mrb[0].mxu0
      %v1022 = vadd.f32 %v918, %v1021
      %v1023 = vpop.f32.mrb[0].mxu0
      %v1024 = vpop.f32.mrb[0].mxu0
      %v1025 = vadd.f32 %v923, %v1024
      %v1026 = vpop.f32.mrb[0].mxu0
      %1027 = vmatprep.mubr.bf16.mxu0 0
      %1028 = vmatmul.mubr.bf16.gmra.mrb[0].mxu0 %v979
      %v1029 = vpop.f32.mrb[0].mxu0
      %v1030 = vadd.f32 %v928, %v1029
      %v1031 = vpop.f32.mrb[0].mxu0
      %v1032 = vpop.f32.mrb[0].mxu0
      %v1033 = vadd.f32 %v933, %v1032
      %v1034 = vpop.f32.mrb[0].mxu0
      %1035 = vmatprep.mubr.bf16.mxu0 0
      %1036 = vmatmul.mubr.bf16.gmra.mrb[0].mxu0 %v982
      %v1037 = vpop.f32.mrb[0].mxu0
      %v1038 = vadd.f32 %v938, %v1037
      %v1039 = vpop.f32.mrb[0].mxu0
      %v1040 = vpop.f32.mrb[0].mxu0
      %v1041 = vadd.f32 %v943, %v1040
      %v1042 = vpop.f32.mrb[0].mxu0
      %1043 = vmatprep.mubr.bf16.mxu0 0
      %1044 = vmatmul.mubr.bf16.gmra.mrb[0].mxu0 %v985
      %v1045 = vpop.f32.mrb[0].mxu0
      %v1046 = vadd.f32 %v948, %v1045
      %v1047 = vpop.f32.mrb[0].mxu0
      %v1048 = vpop.f32.mrb[0].mxu0
      %v1049 = vadd.f32 %v953, %v1048
      %v1050 = vpop.f32.mrb[0].mxu0
      %1051 = vdwg.mxu0
      %v1052 = vmax.f32 %v1022, 0.0
      %v1053 = vmax.f32 %v1025, 0.0
      %v1054 = vmax.f32 %v1030, 0.0
      %v1055 = vmax.f32 %v1033, 0.0
      %v1056 = vmax.f32 %v1038, 0.0
      %v1057 = vmax.f32 %v1041, 0.0
      %v1058 = vmax.f32 %v1046, 0.0
      %v1059 = vmax.f32 %v1049, 0.0
      %v1060 = vld [vmem:[%s7] sm:$0x1]
      %v1061 = vpack.c.bf16 %v1053, %v1052
      %v1062 = vpack.c.bf16 %v1055, %v1054
      %v1063 = vpack.c.bf16 %v1057, %v1056
      %v1064 = vpack.c.bf16 %v1059, %v1058
      %v1065 = vld [vmem:[%s8] sm:$0x3]
      %1067 = vset.pattern.permute.xlu0 0
      %1068 = vperm.xlu0 %1067, %v1065
      %v1069 = vpop.permute.xlu0 %1068
      %vm1071 = vcmask 523264
      %v1073 = vsel %vm1071, %v1060, 0
      %1075 = vmatprep.subr.bf16.mxu0 0
      %1076 = vmatpush1.bf16.msra.mxu0 %v1061
      %1077 = vmatprep.subr.bf16.mxu0 0
      %1078 = vmatpush1.bf16.msra.mxu0 %v1062
      %1079 = vmatprep.subr.bf16.mxu0 0
      %1080 = vmatpush1.bf16.msra.mxu0 %v1063
      %1081 = vmatprep.subr.bf16.mxu0 0
      %1082 = vmatpush1.bf16.msra.mxu0 %v1064
      %1083 = vmatprep.subr.bf16.mxu0 0
      %1084 = vmatpush1.bf16.msra.mxu0 0
      %1085 = vmatprep.subr.bf16.mxu0 0
      %1086 = vmatpush1.bf16.msra.mxu0 0
      %1087 = vmatprep.subr.bf16.mxu0 0
      %1088 = vmatpush1.bf16.msra.mxu0 0
      %1089 = vmatprep.subr.bf16.mxu0 0
      %1090 = vmatpush1.bf16.msra.mxu0 0
      %1091 = vmatprep.subr.bf16.mxu0 0
      %1092 = vmatpush1.bf16.msra.mxu0 0
      %1093 = vmatprep.subr.bf16.mxu0 0
      %1094 = vmatpush1.bf16.msra.mxu0 0
      %1095 = vmatprep.subr.bf16.mxu0 0
      %1096 = vmatpush1.bf16.msra.mxu0 0
      %1097 = vmatprep.subr.bf16.mxu0 0
      %1098 = vmatpush1.bf16.msra.mxu0 0
      %1099 = vmatprep.subr.bf16.mxu0 0
      %1100 = vmatpush1.bf16.msra.mxu0 0
      %1101 = vmatprep.subr.bf16.mxu0 0
      %1102 = vmatpush1.bf16.msra.mxu0 0
      %1103 = vmatprep.subr.bf16.mxu0 0
      %1104 = vmatpush1.bf16.msra.mxu0 0
      %1105 = vmatprep.subr.bf16.mxu0 0
      %1106 = vmatpush1.bf16.msra.mxu0 0
      %1107 = vmatprep.mubr.bf16.mxu0 0
      %1108 = vmatmul.mubr.bf16.gmra.mrb[0].mxu0 %v1073
      %v1109 = vpop.f32.mrb[0].mxu0
      %v1110 = vadd.f32 %v1069, %v1109
      %v1111 = vpop.f32.mrb[0].mxu0
      %v1112 = vpop.f32.mrb[0].mxu0
      %v1113 = vpop.f32.mrb[0].mxu0
      %1114 = vdwg.mxu0
      %v1115 = vtanh.pop %v1110
      %1116 = vst [vmem:[%s349] sm:$0x3] %v1115
      %p1117 = scmp.lt.s32.totalorder %s24, 1
      %s1118 = scalar_select %p1117, %s24, 1
      %p1119 = scmp.lt.s32.totalorder %s25, 2
      %s1120 = scalar_select %p1119, %s25, 2
      %s1121 = smul.addr %s1118, 3
      %s1122 = sadd.s32 %s1120, %s1121
      %s1123 = smul.addr %s1122, 2
      %s1124 = scalar_lea.vmem %s9, %s1123
      // Predicated region
      $region57: #{network_wrapper_forward.1} parent=55 // pred_check
        %p1125 = pneg %p246
      $region58: #{network_wrapper_forward.1} parent=55 // pred_check_branch
        %1127 = sbr.rel (%p1125) target = $region60
      $region59: #{network_wrapper_forward.1} parent=55 // pred_region
        _
      $region60: #{network_wrapper_forward.1} parent=55 // pred_fallthru
        _
    $region56: #{network_wrapper_forward.1} parent=5 // pred_fallthru
      _
    %p1128 = scmp.le.s32.totalorder 2, %s15
    // Predicated region
    $region61: #{network_wrapper_forward.1} parent=5 // pred_check
      %p1129 = pneg %p1128
    $region62: #{network_wrapper_forward.1} parent=5 // pred_check_branch
      %1131 = sbr.rel (%p1129) target = $region64
    $region63: #{network_wrapper_forward.1} parent=5 // pred_region
      %s1132 = ssub.s32 %s15, 2
      // Predicated region
      $region65: #{network_wrapper_forward.1} parent=63 // pred_check
        %p1133 = pneg %p252
      $region66: #{network_wrapper_forward.1} parent=63 // pred_check_branch
        %1135 = sbr.rel (%p1133) target = $region68
      $region67: #{network_wrapper_forward.1} parent=63 // pred_region
        %p1136 = scmp.lt.s32.totalorder %s26, 1
        %s1137 = scalar_select %p1136, %s26, 1
        %p1138 = scmp.lt.s32.totalorder %s27, 2
        %s1139 = scalar_select %p1138, %s27, 2
        %s1140 = smul.addr %s1137, 3
        %s1141 = sadd.s32 %s1139, %s1140
        %s1142 = smul.addr %s1141, 2
        %s1143 = scalar_lea.vmem %s9, %s1142
      $region68: #{network_wrapper_forward.1} parent=63 // pred_fallthru
        _
    $region64: #{network_wrapper_forward.1} parent=5 // pred_fallthru
      _
  $region6: #{network_wrapper_forward.1} parent=0 // loop_footer
    %s19 = sadd.s32 1, %s15
  $region7: #{network_wrapper_forward.1} parent=0 // loop_footer_branch
    %14 = sbr.rel target = $region3
  $region8: #{network_wrapper_forward.1} parent=0 // loop_exit
    _

</llo_original>
